<compile_context>
chip_gen: v7x
topology: tpu7x:2x2x1
jax: 0.10.0
libtpu: 0.0.40
codegen_flags: <defaults>
</compile_context>

<pallas_src>
import functools

import jax
import jax.numpy as jnp
from jax.experimental import pallas as pl
from jax.experimental.pallas import tpu as pltpu  # noqa: F401  (imported per convention)

CONV_FILTERS = ((1, 32), (3, 32), (5, 64), (7, 128))
NUM_FILTERS = sum(oc for _, oc in CONV_FILTERS)      # 256


# ----------------------------------- fused kernel -------------------------------------
def conv_embedding_kernel(taps_ref, cw_ref, cb_ref, pw_ref, pb_ref, o_ref):
    # All four Conv1d filters in one block-structured matmul: (BL, 7E) @ (7E, 256).
    taps = taps_ref[...].astype(jnp.bfloat16)
    feat = jnp.dot(taps, cw_ref[...], preferred_element_type=jnp.float32) + cb_ref[...]
    feat = jnp.maximum(feat, 0.0)                                        # ReLU
    # Projection over the concatenated 256 conv features -> lane-dense padded output.
    out = jnp.dot(feat.astype(jnp.bfloat16), pw_ref[...],
                  preferred_element_type=jnp.float32) + pb_ref[...]
    o_ref[...] = out


# -------------------------------------- wrapper ---------------------------------------
def conv_embedding_forward(inputs, params, *, out_dim):
    emb_tbl = params["embed"]                         # (V, E)  f32
    cw, cb = params["conv_w"], params["conv_b"]       # (7E, 256) bf16, (1, 256) f32
    pw, pb = params["proj_w"], params["proj_b"]       # (256, out_pad) bf16, (1, out_pad) f32

    B, L = inputs.shape
    E = emb_tbl.shape[-1]
    pad_e = (cw.shape[0] // E - 1) // 2
    n_taps = 2 * pad_e + 1
    BL = B * L
    out_pad = pw.shape[-1]

    # Embedding gather fused with the shifted-tap slab build (XLA side, per review):
    # taps[:, j*E:(j+1)*E] at row (b, l) = emb[b, l + j - pad_e] (zero outside [0, L)).
    x = jnp.take(emb_tbl, inputs, axis=0)                               # (B, L, E)
    xp = jnp.pad(x, ((0, 0), (pad_e, pad_e), (0, 0)))                   # (B, L+2p, E)
    taps = jnp.concatenate([xp[:, j:j + L, :] for j in range(n_taps)], axis=-1)
    taps = taps.reshape(BL, n_taps * E)                                 # (BL, 7E)

    def whole(shape):
        nd = len(shape)
        return pl.BlockSpec(shape, lambda i, _nd=nd: (0,) * _nd)

    out = pl.pallas_call(
        conv_embedding_kernel,
        out_shape=jax.ShapeDtypeStruct((BL, out_pad), jnp.float32),
        grid=(1,),                                    # single step: whole slab in VMEM
        in_specs=[whole(taps.shape), whole(cw.shape), whole(cb.shape),
                  whole(pw.shape), whole(pb.shape)],
        out_specs=whole((BL, out_pad)),
    )(taps, cw, cb, pw, pb)

    return out[:, :out_dim].reshape(B, L, out_dim)


# ------------------------------ pure-JAX reference (f32) ------------------------------
def reference_forward(inputs, params, *, out_dim):
    emb_tbl = params["embed"]
    B, L = inputs.shape
    E = emb_tbl.shape[-1]
    cw = params["conv_w"].astype(jnp.float32)
    pw = params["proj_w"].astype(jnp.float32)
    pad_e = (cw.shape[0] // E - 1) // 2
    n_taps = 2 * pad_e + 1
    x = jnp.take(emb_tbl, inputs, axis=0)
    xp = jnp.pad(x, ((0, 0), (pad_e, pad_e), (0, 0)))
    taps = jnp.concatenate([xp[:, j:j + L, :] for j in range(n_taps)], axis=-1)
    taps = taps.reshape(B * L, n_taps * E)
    feat = jnp.maximum(taps @ cw + params["conv_b"], 0.0)
    out = feat @ pw + params["proj_b"]
    return out[:, :out_dim].reshape(B, L, out_dim)


# ------------------------------ deterministic parameters ------------------------------
def init_params(key, vocab_size, embedding_size, output_dim, kind="seq"):
    E = embedding_size
    pad_e = max((k - 1) // 2 for k, _ in CONV_FILTERS)
    n_taps = 2 * pad_e + 1
    out_pad = ((output_dim + 127) // 128) * 128
    keys = iter(jax.random.split(key, 16))

    def nrm(shape, scale=0.05):
        return (scale * jax.random.normal(next(keys), shape)).astype(jnp.float32)

    embed = nrm((vocab_size, E), 0.1)
    if kind == "poc":
        embed = embed.at[0].set(0.0)                  # padding_idx=0

    # Block-structured conv weight: all four Conv1d filters share one (7E, 256) matmul.
    # Row block (j - pad + pad_e)*E holds tap j of a filter with padding pad.
    big = jnp.zeros((n_taps * E, NUM_FILTERS), jnp.float32)
    biases = []
    col = 0
    for (k, oc) in CONV_FILTERS:
        w = nrm((k, E, oc))                           # Conv1d weight in (tap, in, out) layout
        b = nrm((1, oc))
        pad = (k - 1) // 2
        for j in range(k):
            row = (j - pad + pad_e) * E
            big = big.at[row:row + E, col:col + oc].set(w[j])
        biases.append(b)
        col += oc
    conv_b = jnp.concatenate(biases, axis=-1)         # (1, 256)

    # Projection, zero-padded to a lane-dense (128-multiple) output width.
    proj_w = jnp.zeros((NUM_FILTERS, out_pad), jnp.float32)
    proj_w = proj_w.at[:, :output_dim].set(nrm((NUM_FILTERS, output_dim)))
    proj_b = jnp.zeros((1, out_pad), jnp.float32)
    proj_b = proj_b.at[:, :output_dim].set(nrm((1, output_dim)))

    return {
        "embed": embed,
        "conv_w": big.astype(jnp.bfloat16),           # bf16 weight storage (DMA win)
        "conv_b": conv_b,
        "proj_w": proj_w.astype(jnp.bfloat16),
        "proj_b": proj_b,
    }


if __name__ == "__main__":
    key = jax.random.PRNGKey(0)
    k_param, k_in = jax.random.split(key)
    B, L = 2, 8
    VOCAB, E, D_OUT = 22, 32, 32

    params = init_params(k_param, VOCAB, E, D_OUT, kind="seq")
    inputs = jax.random.randint(k_in, (B, L), 0, VOCAB, dtype=jnp.int32)

    fwd = jax.jit(functools.partial(conv_embedding_forward, out_dim=D_OUT))
    out = jax.block_until_ready(fwd(inputs, params))

    assert out.shape == (B, L, D_OUT)
    assert bool(jnp.all(jnp.isfinite(out)))

    ref = reference_forward(inputs, params, out_dim=D_OUT)
    max_err = float(jnp.max(jnp.abs(out - ref)))
    assert max_err < 1e-2, f"max abs err {max_err}"

    print("KERNEL_OK")
</pallas_src>

<mosaic_0001>
module attributes {stable_mosaic.version = 11 : i64} {
  func.func @conv_embedding_kernel(%arg0: i32, %arg1: memref<16x224xf32, #tpu.memory_space<vmem>>, %arg2: memref<224x256xbf16, #tpu.memory_space<vmem>>, %arg3: memref<1x256xf32, #tpu.memory_space<vmem>>, %arg4: memref<256x128xbf16, #tpu.memory_space<vmem>>, %arg5: memref<1x128xf32, #tpu.memory_space<vmem>>, %arg6: memref<16x128xf32, #tpu.memory_space<vmem>>) attributes {dimension_semantics = [#tpu.dimension_semantics<arbitrary>], iteration_bounds = array<i64: 1>, scalar_prefetch = 0 : i64, scratch_operands = 0 : i64, tpu.core_type = #tpu.core_type<tc>, window_params = [{pipeline_mode = #tpu.pipeline_mode<synchronous>, transform_indices = @transform_0, window_bounds = array<i64: 16, 224>}, {pipeline_mode = #tpu.pipeline_mode<synchronous>, transform_indices = @transform_1, window_bounds = array<i64: 224, 256>}, {pipeline_mode = #tpu.pipeline_mode<synchronous>, transform_indices = @transform_2, window_bounds = array<i64: 1, 256>}, {pipeline_mode = #tpu.pipeline_mode<synchronous>, transform_indices = @transform_3, window_bounds = array<i64: 256, 128>}, {pipeline_mode = #tpu.pipeline_mode<synchronous>, transform_indices = @transform_4, window_bounds = array<i64: 1, 128>}, {pipeline_mode = #tpu.pipeline_mode<synchronous>, transform_indices = @transform_5, window_bounds = array<i64: 16, 128>}]} {
    %c0 = arith.constant 0 : index
    %c0_0 = arith.constant 0 : index
    %0 = vector.load %arg1[%c0, %c0_0] : memref<16x224xf32, #tpu.memory_space<vmem>>, vector<16x224xf32>
    %1 = arith.truncf %0 : vector<16x224xf32> to vector<16x224xbf16>
    %c0_1 = arith.constant 0 : index
    %c0_2 = arith.constant 0 : index
    %2 = vector.load %arg2[%c0_1, %c0_2] : memref<224x256xbf16, #tpu.memory_space<vmem>>, vector<224x256xbf16>
    %cst = arith.constant dense<0.000000e+00> : vector<16x256xf32>
    %3 = tpu.matmul %1, %2, %cst {dimension_numbers = #tpu.dot_dimension_numbers<[1], [0], [0], [1], [0, 0, 1, 1], [], []>} : vector<16x224xbf16>, vector<224x256xbf16>, vector<16x256xf32> -> vector<16x256xf32>
    %c0_3 = arith.constant 0 : index
    %c0_4 = arith.constant 0 : index
    %4 = vector.load %arg3[%c0_3, %c0_4] : memref<1x256xf32, #tpu.memory_space<vmem>>, vector<1x256xf32>
    %5 = vector.broadcast %4 : vector<1x256xf32> to vector<16x256xf32>
    %6 = arith.addf %3, %5 : vector<16x256xf32>
    %cst_5 = arith.constant 0.000000e+00 : f32
    %7 = vector.broadcast %cst_5 : f32 to vector<16x256xf32>
    %8 = arith.maximumf %6, %7 : vector<16x256xf32>
    %9 = arith.truncf %8 : vector<16x256xf32> to vector<16x256xbf16>
    %c0_6 = arith.constant 0 : index
    %c0_7 = arith.constant 0 : index
    %10 = vector.load %arg4[%c0_6, %c0_7] : memref<256x128xbf16, #tpu.memory_space<vmem>>, vector<256x128xbf16>
    %cst_8 = arith.constant dense<0.000000e+00> : vector<16x128xf32>
    %11 = tpu.matmul %9, %10, %cst_8 {dimension_numbers = #tpu.dot_dimension_numbers<[1], [0], [0], [1], [0, 0, 1, 1], [], []>} : vector<16x256xbf16>, vector<256x128xbf16>, vector<16x128xf32> -> vector<16x128xf32>
    %c0_9 = arith.constant 0 : index
    %c0_10 = arith.constant 0 : index
    %12 = vector.load %arg5[%c0_9, %c0_10] : memref<1x128xf32, #tpu.memory_space<vmem>>, vector<1x128xf32>
    %13 = vector.broadcast %12 : vector<1x128xf32> to vector<16x128xf32>
    %14 = arith.addf %11, %13 : vector<16x128xf32>
    %c0_11 = arith.constant 0 : index
    %c0_12 = arith.constant 0 : index
    %15 = vector.load %arg6[%c0_11, %c0_12] : memref<16x128xf32, #tpu.memory_space<vmem>>, vector<16x128xf32>
    tpu.vector_store %arg6[%c0_11, %c0_12], %14 {strides = array<i32>} : memref<16x128xf32, #tpu.memory_space<vmem>>, vector<16x128xf32>,
    return
  }
  func.func @transform_0(%arg0: i32) -> (i32, i32) {
    %c0_i32 = arith.constant 0 : i32
    %c0_i32_0 = arith.constant 0 : i32
    %c0_i32_1 = arith.constant 0 : i32
    return %c0_i32, %c0_i32_0 : i32, i32
  }
  func.func @transform_1(%arg0: i32) -> (i32, i32) {
    %c0_i32 = arith.constant 0 : i32
    %c0_i32_0 = arith.constant 0 : i32
    %c0_i32_1 = arith.constant 0 : i32
    return %c0_i32, %c0_i32_0 : i32, i32
  }
  func.func @transform_2(%arg0: i32) -> (i32, i32) {
    %c0_i32 = arith.constant 0 : i32
    %c0_i32_0 = arith.constant 0 : i32
    %c0_i32_1 = arith.constant 0 : i32
    return %c0_i32, %c0_i32_0 : i32, i32
  }
  func.func @transform_3(%arg0: i32) -> (i32, i32) {
    %c0_i32 = arith.constant 0 : i32
    %c0_i32_0 = arith.constant 0 : i32
    %c0_i32_1 = arith.constant 0 : i32
    return %c0_i32, %c0_i32_0 : i32, i32
  }
  func.func @transform_4(%arg0: i32) -> (i32, i32) {
    %c0_i32 = arith.constant 0 : i32
    %c0_i32_0 = arith.constant 0 : i32
    %c0_i32_1 = arith.constant 0 : i32
    return %c0_i32, %c0_i32_0 : i32, i32
  }
  func.func @transform_5(%arg0: i32) -> (i32, i32) {
    %c0_i32 = arith.constant 0 : i32
    %c0_i32_0 = arith.constant 0 : i32
    %c0_i32_1 = arith.constant 0 : i32
    return %c0_i32, %c0_i32_0 : i32, i32
  }
}

</mosaic_0001>

<llo_original>
// kernel: conv_embedding_forward.1
$region0: #{conv_embedding_forward.1}
  #allocation0 [shape = 'u32[]', space=smem, size = 0x4, offset = 0x4, fixed_abs, tag = 'smem constant byte address 0x4 - core index']
  #allocation1 [shape = 'u32[144,128]{1,0:T(1,128)}', space=vmem, size = 0x12000, scoped, tag = 'internal scratch']
  %s0 = inlined_call_operand.vmem [shape: f32[16,224], index: 0, kind: input, shape index: {}]
  %s1 = inlined_call_operand.vmem [shape: bf16[224,256], index: 1, kind: input, shape index: {}]
  %s2 = inlined_call_operand.vmem [shape: f32[1,256], index: 2, kind: input, shape index: {}]
  %s3 = inlined_call_operand.vmem [shape: bf16[256,128], index: 3, kind: input, shape index: {}]
  %s4 = inlined_call_operand.vmem [shape: f32[1,128], index: 4, kind: input, shape index: {}]
  %s5 = inlined_call_operand.vmem [shape: f32[16,128], index: 5, kind: output, shape index: {}]
  %s6 = sld [smem:[#allocation0]]
  $region30: #{conv_embedding_forward.1} parent=0
    _
  %s8 = ssub.s32 1, %s6
  %s9 = scalar_select 0, %s8, %s6
  // Predicated region
  $region2: #{conv_embedding_forward.1} parent=0 // pred_check
    _
  $region3: #{conv_embedding_forward.1} parent=0 // pred_check_branch
    %11 = sbr.rel (0) target = $region5
  $region4: #{conv_embedding_forward.1} parent=0 // pred_region
    _
  $region5: #{conv_embedding_forward.1} parent=0 // pred_fallthru
    _
  // Predicated region
  $region6: #{conv_embedding_forward.1} parent=0 // pred_check
    _
  $region7: #{conv_embedding_forward.1} parent=0 // pred_check_branch
    %13 = sbr.rel (0) target = $region9
  $region8: #{conv_embedding_forward.1} parent=0 // pred_region
    _
  $region9: #{conv_embedding_forward.1} parent=0 // pred_fallthru
    _
  // Predicated region
  $region10: #{conv_embedding_forward.1} parent=0 // pred_check
    _
  $region11: #{conv_embedding_forward.1} parent=0 // pred_check_branch
    %15 = sbr.rel (0) target = $region13
  $region12: #{conv_embedding_forward.1} parent=0 // pred_region
    _
  $region13: #{conv_embedding_forward.1} parent=0 // pred_fallthru
    _
  // Predicated region
  $region14: #{conv_embedding_forward.1} parent=0 // pred_check
    _
  $region15: #{conv_embedding_forward.1} parent=0 // pred_check_branch
    %17 = sbr.rel (0) target = $region17
  $region16: #{conv_embedding_forward.1} parent=0 // pred_region
    _
  $region17: #{conv_embedding_forward.1} parent=0 // pred_fallthru
    _
  // Predicated region
  $region18: #{conv_embedding_forward.1} parent=0 // pred_check
    _
  $region19: #{conv_embedding_forward.1} parent=0 // pred_check_branch
    %19 = sbr.rel (0) target = $region21
  $region20: #{conv_embedding_forward.1} parent=0 // pred_region
    _
  $region21: #{conv_embedding_forward.1} parent=0 // pred_fallthru
    _
  %v21 = vld [vmem:[%s0] sm:$0xff]
  %v22 = vld [vmem:[%s0 + $0x8] sm:$0xff]
  %v23 = vld [vmem:[%s0 + $0x10] sm:$0xff]
  %v24 = vld [vmem:[%s0 + $0x18] sm:$0xff]
  %v25 = vpack.c.bf16 %v23, %v21
  %v26 = vpack.c.bf16 %v24, %v22
  %v27 = vld [vmem:[%s1] sm:$0xff]
  %v28 = vld [vmem:[%s1 + $0x8] sm:$0xff]
  %v29 = vld [vmem:[%s1 + $0x10] sm:$0xff]
  %v30 = vld [vmem:[%s1 + $0x18] sm:$0xff]
  %v31 = vld [vmem:[%s1 + $0x20] sm:$0xff]
  %v32 = vld [vmem:[%s1 + $0x28] sm:$0xff]
  %v33 = vld [vmem:[%s1 + $0x30] sm:$0xff]
  %v34 = vld [vmem:[%s1 + $0x38] sm:$0xff]
  %v35 = vld [vmem:[%s1 + $0x40] sm:$0xff]
  %v36 = vld [vmem:[%s1 + $0x48] sm:$0xff]
  %v37 = vld [vmem:[%s1 + $0x50] sm:$0xff]
  %v38 = vld [vmem:[%s1 + $0x58] sm:$0xff]
  %v39 = vld [vmem:[%s1 + $0x60] sm:$0xff]
  %v40 = vld [vmem:[%s1 + $0x68] sm:$0xff]
  %v41 = vld [vmem:[%s1 + $0x70] sm:$0xff]
  %v42 = vld [vmem:[%s1 + $0x78] sm:$0xff]
  %v43 = vld [vmem:[%s1 + $0x80] sm:$0xff]
  %v44 = vld [vmem:[%s1 + $0x88] sm:$0xff]
  %v45 = vld [vmem:[%s1 + $0x90] sm:$0xff]
  %v46 = vld [vmem:[%s1 + $0x98] sm:$0xff]
  %v47 = vld [vmem:[%s1 + $0xa0] sm:$0xff]
  %v48 = vld [vmem:[%s1 + $0xa8] sm:$0xff]
  %v49 = vld [vmem:[%s1 + $0xb0] sm:$0xff]
  %v50 = vld [vmem:[%s1 + $0xb8] sm:$0xff]
  %v51 = vld [vmem:[%s1 + $0xc0] sm:$0xff]
  %v52 = vld [vmem:[%s1 + $0xc8] sm:$0xff]
  %v53 = vld [vmem:[%s1 + $0xd0] sm:$0xff]
  %v54 = vld [vmem:[%s1 + $0xd8] sm:$0xff]
  %v55 = vld [vmem:[%s2] sm:$0x3]
  %v57 = vlaneseq
  %v58 = vshrl.u32 %v57, 7
  %v59 = vsub.s32 0, %v58
  %v60 = vrot.slane %v55, %v59
  %v61 = vlaneseq
  %v62 = vshrl.u32 %v61, 7
  %v63 = vsub.s32 1, %v62
  %v64 = vrot.slane %v55, %v63
  %v95 = vunpack.c.l.b16 %v27
  %v96 = vunpack.c.h.b16 %v27
  %v97 = vunpack.c.l.b16 %v28
  %v98 = vunpack.c.h.b16 %v28
  %v99 = vunpack.c.l.b16 %v29
  %v100 = vunpack.c.h.b16 %v29
  %v101 = vunpack.c.l.b16 %v30
  %v102 = vunpack.c.h.b16 %v30
  %v103 = vunpack.c.l.b16 %v31
  %v104 = vunpack.c.h.b16 %v31
  %v105 = vunpack.c.l.b16 %v32
  %v106 = vunpack.c.h.b16 %v32
  %v107 = vunpack.c.l.b16 %v33
  %v108 = vunpack.c.h.b16 %v33
  %v109 = vunpack.c.l.b16 %v34
  %v110 = vunpack.c.h.b16 %v34
  %v111 = vunpack.c.l.b16 %v35
  %v112 = vunpack.c.h.b16 %v35
  %v113 = vunpack.c.l.b16 %v36
  %v114 = vunpack.c.h.b16 %v36
  %v115 = vunpack.c.l.b16 %v37
  %v116 = vunpack.c.h.b16 %v37
  %v117 = vunpack.c.l.b16 %v38
  %v118 = vunpack.c.h.b16 %v38
  %v119 = vunpack.c.l.b16 %v39
  %v120 = vunpack.c.h.b16 %v39
  %v121 = vunpack.c.l.b16 %v40
  %v122 = vunpack.c.h.b16 %v40
  %v123 = vunpack.c.l.b16 %v41
  %v124 = vunpack.c.h.b16 %v41
  %v125 = vunpack.c.l.b16 %v42
  %v126 = vunpack.c.h.b16 %v42
  %v127 = vunpack.c.l.b16 %v43
  %v128 = vunpack.c.h.b16 %v43
  %v129 = vunpack.c.l.b16 %v44
  %v130 = vunpack.c.h.b16 %v44
  %v131 = vunpack.c.l.b16 %v45
  %v132 = vunpack.c.h.b16 %v45
  %v133 = vunpack.c.l.b16 %v46
  %v134 = vunpack.c.h.b16 %v46
  %v135 = vunpack.c.l.b16 %v47
  %v136 = vunpack.c.h.b16 %v47
  %v137 = vunpack.c.l.b16 %v48
  %v138 = vunpack.c.h.b16 %v48
  %v139 = vunpack.c.l.b16 %v49
  %v140 = vunpack.c.h.b16 %v49
  %v141 = vunpack.c.l.b16 %v50
  %v142 = vunpack.c.h.b16 %v50
  %v143 = vunpack.c.l.b16 %v51
  %v144 = vunpack.c.h.b16 %v51
  %v145 = vunpack.c.l.b16 %v52
  %v146 = vunpack.c.h.b16 %v52
  %v147 = vunpack.c.l.b16 %v53
  %v148 = vunpack.c.h.b16 %v53
  %v149 = vunpack.c.l.b16 %v54
  %v150 = vunpack.c.h.b16 %v54
  %v151 = vpack.c.b16 %v97, %v95
  %v152 = vpack.c.b16 %v98, %v96
  %v153 = vpack.c.b16 %v101, %v99
  %v154 = vpack.c.b16 %v102, %v100
  %v155 = vpack.c.b16 %v105, %v103
  %v156 = vpack.c.b16 %v106, %v104
  %v157 = vpack.c.b16 %v109, %v107
  %v158 = vpack.c.b16 %v110, %v108
  %v159 = vpack.c.b16 %v113, %v111
  %v160 = vpack.c.b16 %v114, %v112
  %v161 = vpack.c.b16 %v117, %v115
  %v162 = vpack.c.b16 %v118, %v116
  %v163 = vpack.c.b16 %v121, %v119
  %v164 = vpack.c.b16 %v122, %v120
  %v165 = vpack.c.b16 %v125, %v123
  %v166 = vpack.c.b16 %v126, %v124
  %v167 = vpack.c.b16 %v129, %v127
  %v168 = vpack.c.b16 %v130, %v128
  %v169 = vpack.c.b16 %v133, %v131
  %v170 = vpack.c.b16 %v134, %v132
  %v171 = vpack.c.b16 %v137, %v135
  %v172 = vpack.c.b16 %v138, %v136
  %v173 = vpack.c.b16 %v141, %v139
  %v174 = vpack.c.b16 %v142, %v140
  %v175 = vpack.c.b16 %v145, %v143
  %v176 = vpack.c.b16 %v146, %v144
  %v177 = vpack.c.b16 %v149, %v147
  %v178 = vpack.c.b16 %v150, %v148
  %vm207 = vcmask 785408
  %v209 = vsel %vm207, %v26, 0
  %211 = vmatprep.subr.bf16.mxu0 %v152
  %212 = vmatpush1.bf16.msra.mxu0 %v151
  %213 = vmatprep.subr.bf16.mxu0 %v154
  %214 = vmatpush1.bf16.msra.mxu0 %v153
  %215 = vmatprep.subr.bf16.mxu0 %v156
  %216 = vmatpush1.bf16.msra.mxu0 %v155
  %217 = vmatprep.subr.bf16.mxu0 %v158
  %218 = vmatpush1.bf16.msra.mxu0 %v157
  %219 = vmatprep.subr.bf16.mxu0 %v160
  %220 = vmatpush1.bf16.msra.mxu0 %v159
  %221 = vmatprep.subr.bf16.mxu0 %v162
  %222 = vmatpush1.bf16.msra.mxu0 %v161
  %223 = vmatprep.subr.bf16.mxu0 %v164
  %224 = vmatpush1.bf16.msra.mxu0 %v163
  %225 = vmatprep.subr.bf16.mxu0 %v166
  %226 = vmatpush1.bf16.msra.mxu0 %v165
  %227 = vmatprep.subr.bf16.mxu0 %v168
  %228 = vmatpush1.bf16.msra.mxu0 %v167
  %229 = vmatprep.subr.bf16.mxu0 %v170
  %230 = vmatpush1.bf16.msra.mxu0 %v169
  %231 = vmatprep.subr.bf16.mxu0 %v172
  %232 = vmatpush1.bf16.msra.mxu0 %v171
  %233 = vmatprep.subr.bf16.mxu0 %v174
  %234 = vmatpush1.bf16.msra.mxu0 %v173
  %235 = vmatprep.subr.bf16.mxu0 %v176
  %236 = vmatpush1.bf16.msra.mxu0 %v175
  %237 = vmatprep.subr.bf16.mxu0 %v178
  %238 = vmatpush1.bf16.msra.mxu0 %v177
  %239 = vmatprep.subr.bf16.mxu0 0
  %240 = vmatpush1.bf16.msra.mxu0 0
  %241 = vmatprep.subr.bf16.mxu0 0
  %242 = vmatpush1.bf16.msra.mxu0 0
  %243 = vmatprep.mubr.bf16.mxu0 %v209
  %244 = vmatmul.mubr.bf16.gmra.mrb[0].mxu0 %v25
  %v245 = vpop.f32.mrb[0].mxu0
  %v246 = vadd.f32 %v60, %v245
  %v247 = vpop.f32.mrb[0].mxu0
  %v248 = vadd.f32 %v64, %v247
  %v249 = vpop.f32.mrb[0].mxu0
  %v250 = vadd.f32 %v60, %v249
  %v251 = vpop.f32.mrb[0].mxu0
  %v252 = vadd.f32 %v64, %v251
  %253 = vdwg.mxu0
  %v254 = vmax.f32 %v246, 0.0
  %v255 = vmax.f32 %v248, 0.0
  %v256 = vmax.f32 %v250, 0.0
  %v257 = vmax.f32 %v252, 0.0
  %v258 = vpack.c.bf16 %v256, %v254
  %v259 = vpack.c.bf16 %v257, %v255
  %v260 = vld [vmem:[%s3] sm:$0xf]
  %v261 = vld [vmem:[%s3 + $0x4] sm:$0xf]
  %v262 = vld [vmem:[%s3 + $0x8] sm:$0xf]
  %v263 = vld [vmem:[%s3 + $0xc] sm:$0xf]
  %v264 = vld [vmem:[%s3 + $0x10] sm:$0xf]
  %v265 = vld [vmem:[%s3 + $0x14] sm:$0xf]
  %v266 = vld [vmem:[%s3 + $0x18] sm:$0xf]
  %v267 = vld [vmem:[%s3 + $0x1c] sm:$0xf]
  %v268 = vld [vmem:[%s3 + $0x20] sm:$0xf]
  %v269 = vld [vmem:[%s3 + $0x24] sm:$0xf]
  %v270 = vld [vmem:[%s3 + $0x28] sm:$0xf]
  %v271 = vld [vmem:[%s3 + $0x2c] sm:$0xf]
  %v272 = vld [vmem:[%s3 + $0x30] sm:$0xf]
  %v273 = vld [vmem:[%s3 + $0x34] sm:$0xf]
  %v274 = vld [vmem:[%s3 + $0x38] sm:$0xf]
  %v275 = vld [vmem:[%s3 + $0x3c] sm:$0xf]
  %v276 = vld [vmem:[%s3 + $0x40] sm:$0xf]
  %v277 = vld [vmem:[%s3 + $0x44] sm:$0xf]
  %v278 = vld [vmem:[%s3 + $0x48] sm:$0xf]
  %v279 = vld [vmem:[%s3 + $0x4c] sm:$0xf]
  %v280 = vld [vmem:[%s3 + $0x50] sm:$0xf]
  %v281 = vld [vmem:[%s3 + $0x54] sm:$0xf]
  %v282 = vld [vmem:[%s3 + $0x58] sm:$0xf]
  %v283 = vld [vmem:[%s3 + $0x5c] sm:$0xf]
  %v284 = vld [vmem:[%s3 + $0x60] sm:$0xf]
  %v285 = vld [vmem:[%s3 + $0x64] sm:$0xf]
  %v286 = vld [vmem:[%s3 + $0x68] sm:$0xf]
  %v287 = vld [vmem:[%s3 + $0x6c] sm:$0xf]
  %v288 = vld [vmem:[%s3 + $0x70] sm:$0xf]
  %v289 = vld [vmem:[%s3 + $0x74] sm:$0xf]
  %v290 = vld [vmem:[%s3 + $0x78] sm:$0xf]
  %v291 = vld [vmem:[%s3 + $0x7c] sm:$0xf]
  %v292 = vld [vmem:[%s4] sm:$0x1]
  %v294 = vlaneseq
  %v295 = vshrl.u32 %v294, 7
  %v296 = vsub.s32 0, %v295
  %v297 = vrot.slane %v292, %v296
  %v331 = vunpack.c.l.b16 %v260
  %v332 = vunpack.c.l.b16 %v261
  %v333 = vunpack.c.l.b16 %v262
  %v334 = vunpack.c.l.b16 %v263
  %v335 = vunpack.c.l.b16 %v264
  %v336 = vunpack.c.l.b16 %v265
  %v337 = vunpack.c.l.b16 %v266
  %v338 = vunpack.c.l.b16 %v267
  %v339 = vunpack.c.l.b16 %v268
  %v340 = vunpack.c.l.b16 %v269
  %v341 = vunpack.c.l.b16 %v270
  %v342 = vunpack.c.l.b16 %v271
  %v343 = vunpack.c.l.b16 %v272
  %v344 = vunpack.c.l.b16 %v273
  %v345 = vunpack.c.l.b16 %v274
  %v346 = vunpack.c.l.b16 %v275
  %v347 = vunpack.c.l.b16 %v276
  %v348 = vunpack.c.l.b16 %v277
  %v349 = vunpack.c.l.b16 %v278
  %v350 = vunpack.c.l.b16 %v279
  %v351 = vunpack.c.l.b16 %v280
  %v352 = vunpack.c.l.b16 %v281
  %v353 = vunpack.c.l.b16 %v282
  %v354 = vunpack.c.l.b16 %v283
  %v355 = vunpack.c.l.b16 %v284
  %v356 = vunpack.c.l.b16 %v285
  %v357 = vunpack.c.l.b16 %v286
  %v358 = vunpack.c.l.b16 %v287
  %v359 = vunpack.c.l.b16 %v288
  %v360 = vunpack.c.l.b16 %v289
  %v361 = vunpack.c.l.b16 %v290
  %v362 = vunpack.c.l.b16 %v291
  %v363 = vpack.c.b16 %v332, %v331
  %v364 = vpack.c.b16 %v334, %v333
  %v365 = vpack.c.b16 %v336, %v335
  %v366 = vpack.c.b16 %v338, %v337
  %v367 = vpack.c.b16 %v340, %v339
  %v368 = vpack.c.b16 %v342, %v341
  %v369 = vpack.c.b16 %v344, %v343
  %v370 = vpack.c.b16 %v346, %v345
  %v371 = vpack.c.b16 %v348, %v347
  %v372 = vpack.c.b16 %v350, %v349
  %v373 = vpack.c.b16 %v352, %v351
  %v374 = vpack.c.b16 %v354, %v353
  %v375 = vpack.c.b16 %v356, %v355
  %v376 = vpack.c.b16 %v358, %v357
  %v377 = vpack.c.b16 %v360, %v359
  %v378 = vpack.c.b16 %v362, %v361
  %395 = vmatprep.subr.bf16.mxu0 0
  %396 = vmatpush1.bf16.msra.mxu0 %v363
  %397 = vmatprep.subr.bf16.mxu0 0
  %398 = vmatpush1.bf16.msra.mxu0 %v364
  %399 = vmatprep.subr.bf16.mxu0 0
  %400 = vmatpush1.bf16.msra.mxu0 %v365
  %401 = vmatprep.subr.bf16.mxu0 0
  %402 = vmatpush1.bf16.msra.mxu0 %v366
  %403 = vmatprep.subr.bf16.mxu0 0
  %404 = vmatpush1.bf16.msra.mxu0 %v367
  %405 = vmatprep.subr.bf16.mxu0 0
  %406 = vmatpush1.bf16.msra.mxu0 %v368
  %407 = vmatprep.subr.bf16.mxu0 0
  %408 = vmatpush1.bf16.msra.mxu0 %v369
  %409 = vmatprep.subr.bf16.mxu0 0
  %410 = vmatpush1.bf16.msra.mxu0 %v370
  %411 = vmatprep.subr.bf16.mxu0 0
  %412 = vmatpush1.bf16.msra.mxu0 %v371
  %413 = vmatprep.subr.bf16.mxu0 0
  %414 = vmatpush1.bf16.msra.mxu0 %v372
  %415 = vmatprep.subr.bf16.mxu0 0
  %416 = vmatpush1.bf16.msra.mxu0 %v373
  %417 = vmatprep.subr.bf16.mxu0 0
  %418 = vmatpush1.bf16.msra.mxu0 %v374
  %419 = vmatprep.subr.bf16.mxu0 0
  %420 = vmatpush1.bf16.msra.mxu0 %v375
  %421 = vmatprep.subr.bf16.mxu0 0
  %422 = vmatpush1.bf16.msra.mxu0 %v376
  %423 = vmatprep.subr.bf16.mxu0 0
  %424 = vmatpush1.bf16.msra.mxu0 %v377
  %425 = vmatprep.subr.bf16.mxu0 0
  %426 = vmatpush1.bf16.msra.mxu0 %v378
  %427 = vmatprep.mubr.bf16.mxu0 %v259
  %428 = vmatmul.mubr.bf16.gmra.mrb[0].mxu0 %v258
  %v429 = vpop.f32.mrb[0].mxu0
  %v430 = vadd.f32 %v297, %v429
  %v431 = vpop.f32.mrb[0].mxu0
  %v432 = vpop.f32.mrb[0].mxu0
  %v433 = vadd.f32 %v297, %v432
  %v434 = vpop.f32.mrb[0].mxu0
  %435 = vdwg.mxu0
  %436 = vst [vmem:[%s5] sm:$0xff] %v430
  %437 = vst [vmem:[%s5 + $0x8] sm:$0xff] %v433
  // Predicated region
  $region22: #{conv_embedding_forward.1} parent=0 // pred_check
    _
  $region23: #{conv_embedding_forward.1} parent=0 // pred_check_branch
    %439 = sbr.rel (0) target = $region25
  $region24: #{conv_embedding_forward.1} parent=0 // pred_region
    _
  $region25: #{conv_embedding_forward.1} parent=0 // pred_fallthru
    _
  // Predicated region
  $region26: #{conv_embedding_forward.1} parent=0 // pred_check
    _
  $region27: #{conv_embedding_forward.1} parent=0 // pred_check_branch
    %441 = sbr.rel (0) target = $region29
  $region28: #{conv_embedding_forward.1} parent=0 // pred_region
    _
  $region29: #{conv_embedding_forward.1} parent=0 // pred_fallthru
    _

</llo_original>
